<compile_context>
chip_gen: v7x
topology: tpu7x:2x2x1
jax: 0.10.0
libtpu: 0.0.40
codegen_flags: <defaults>
</compile_context>

<pallas_src>
import jax
import jax.numpy as jnp
from jax.experimental import pallas as pl
from jax.experimental.pallas import tpu as pltpu


def _bottle_net_kernel(x_ref, w_ref, b_ref, o_ref):
    # One (tm, F) x (F, 20) matmul on the MXU + bias add + ReLU.
    x = x_ref[...]                                           # (tm, F) streamed
    w = w_ref[...]                                           # (F, 20) resident
    b = b_ref[...]                                           # (1, 20) resident
    y = jnp.dot(x, w, preferred_element_type=jnp.float32)    # (tm, 20) f32 acc
    o_ref[...] = jnp.maximum(y + b, 0.0).astype(o_ref.dtype)


def prepare_bottle_net_params(w, b):
    """One-time parameter prep (hoisted out of the forward path).

    w : (20, F) float32   PyTorch nn.Linear weight layout
    b : (20,)   float32
    returns (w_t, b_row) with w_t: (F, 20), b_row: (1, 20)
    """
    w_t = jnp.asarray(w, jnp.float32).T
    b_row = jnp.asarray(b, jnp.float32).reshape(1, -1)
    return w_t, b_row


def _round_up(x, m):
    return m * pl.cdiv(x, m)


def bottle_net_forward(x, w_t, b_row, *, block_m=1024):
    """y = relu(x @ w_t + b_row), matching torch.nn.Linear(F, 20) + relu.

    x     : (B, F)  float32
    w_t   : (F, 20) float32  (already transposed, from prepare_bottle_net_params)
    b_row : (1, 20) float32
    """
    B, F = x.shape
    out_features = w_t.shape[1]

    # ---- batch tile size ----------------------------------------------------
    # Aim for >= 2 grid steps (v7x has 2 TensorCores; "parallel" shards them),
    # sublane-aligned (multiple of 8), and within a per-generation VMEM budget.
    f_lane = 128 * pl.cdiv(F, 128)                 # x tile lane width in VMEM
    n_lane = 128 * pl.cdiv(out_features, 128)      # out tile lane width in VMEM
    bytes_per_row = 4 * 2 * (f_lane + n_lane)      # double-buffered x + out, per row
    weight_bytes = 4 * _round_up(F, 8) * n_lane    # resident weight (bias negligible)

    vmem_budget = 40 * 1024 * 1024                 # safe even on v7x (64 MiB VMEM)
    avail = max(vmem_budget - weight_bytes - (1 << 20), 8 * bytes_per_row)
    tm_cap = max(8, 8 * (avail // (8 * bytes_per_row)))

    tm_half = _round_up(pl.cdiv(B, 2), 8)          # split batch across >= 2 tiles
    tm = int(max(8, min(block_m, tm_half, tm_cap)))
    grid = (pl.cdiv(B, tm),)

    needed = weight_bytes + tm * bytes_per_row + (1 << 20)
    vmem_limit = int(min(48 * 1024 * 1024, max(16 * 1024 * 1024, 2 * needed)))

    # Advisory cost: reflects actual (unpadded) HBM traffic and logical flops.
    cost = pl.CostEstimate(
        flops=2 * B * F * out_features,
        transcendentals=0,
        bytes_accessed=4 * (B * F + F * out_features + out_features
                            + B * out_features),
    )

    return pl.pallas_call(
        _bottle_net_kernel,
        out_shape=jax.ShapeDtypeStruct((B, out_features), jnp.float32),
        grid=grid,
        in_specs=[
            pl.BlockSpec((tm, F), lambda i: (i, 0)),               # streamed x tiles
            pl.BlockSpec((F, out_features), lambda i: (0, 0)),     # resident weight
            pl.BlockSpec((1, out_features), lambda i: (0, 0)),     # resident bias
        ],
        out_specs=pl.BlockSpec((tm, out_features), lambda i: (i, 0)),
        compiler_params=pltpu.CompilerParams(
            dimension_semantics=("parallel",),
            vmem_limit_bytes=vmem_limit,
        ),
        cost_estimate=cost,
    )(x, w_t, b_row)


if __name__ == "__main__":
    key = jax.random.PRNGKey(0)
    k_x, k_w, k_b, k_x2 = jax.random.split(key, 4)

    batch = 8
    no_input_features = 32
    out_features = 20

    # Deterministic synthetic parameters (PyTorch Linear: weight (20, F), bias (20,)).
    bound = 1.0 / (no_input_features ** 0.5)
    w = jax.random.uniform(k_w, (out_features, no_input_features),
                           minval=-bound, maxval=bound, dtype=jnp.float32)
    b = jax.random.uniform(k_b, (out_features,),
                           minval=-bound, maxval=bound, dtype=jnp.float32)
    x = jax.random.normal(k_x, (batch, no_input_features), dtype=jnp.float32)

    # One-time parameter prep (hoisted out of the forward path).
    w_t, b_row = prepare_bottle_net_params(w, b)

    # Small case (single grid step).
    y = jax.block_until_ready(bottle_net_forward(x, w_t, b_row))
    y_ref = jnp.maximum(x @ w.T + b, 0.0)
    assert y.shape == (batch, out_features)
    assert jnp.allclose(y, y_ref, atol=1e-5, rtol=1e-5)

    # Tiled case (grid >= 2, exercises the resident-weight / parallel path).
    x_big = jax.random.normal(k_x2, (1024, no_input_features), dtype=jnp.float32)
    y_big = jax.block_until_ready(bottle_net_forward(x_big, w_t, b_row))
    y_big_ref = jnp.maximum(x_big @ w.T + b, 0.0)
    assert y_big.shape == (1024, out_features)
    assert jnp.allclose(y_big, y_big_ref, atol=1e-5, rtol=1e-5)

    print("KERNEL_OK")
</pallas_src>

<mosaic_0001>
module attributes {stable_mosaic.version = 11 : i64} {
  func.func @_bottle_net_kernel(%arg0: i32, %arg1: memref<8x32xf32, #tpu.memory_space<vmem>>, %arg2: memref<32x20xf32, #tpu.memory_space<vmem>>, %arg3: memref<1x20xf32, #tpu.memory_space<vmem>>, %arg4: memref<8x20xf32, #tpu.memory_space<vmem>>) attributes {dimension_semantics = [#tpu.dimension_semantics<parallel>], iteration_bounds = array<i64: 1>, scalar_prefetch = 0 : i64, scratch_operands = 0 : i64, tpu.core_type = #tpu.core_type<tc>, window_params = [{transform_indices = @transform_0, window_bounds = array<i64: 8, 32>}, {pipeline_mode = #tpu.pipeline_mode<synchronous>, transform_indices = @transform_1, window_bounds = array<i64: 32, 20>}, {pipeline_mode = #tpu.pipeline_mode<synchronous>, transform_indices = @transform_2, window_bounds = array<i64: 1, 20>}, {transform_indices = @transform_3, window_bounds = array<i64: 8, 20>}]} {
    %c0 = arith.constant 0 : index
    %c0_0 = arith.constant 0 : index
    %0 = vector.load %arg1[%c0, %c0_0] : memref<8x32xf32, #tpu.memory_space<vmem>>, vector<8x32xf32>
    %c0_1 = arith.constant 0 : index
    %c0_2 = arith.constant 0 : index
    %1 = vector.load %arg2[%c0_1, %c0_2] : memref<32x20xf32, #tpu.memory_space<vmem>>, vector<32x20xf32>
    %c0_3 = arith.constant 0 : index
    %c0_4 = arith.constant 0 : index
    %2 = vector.load %arg3[%c0_3, %c0_4] : memref<1x20xf32, #tpu.memory_space<vmem>>, vector<1x20xf32>
    %cst = arith.constant dense<0.000000e+00> : vector<8x20xf32>
    %3 = tpu.matmul %0, %1, %cst {dimension_numbers = #tpu.dot_dimension_numbers<[1], [0], [0], [1], [0, 0, 1, 1], [], []>} : vector<8x32xf32>, vector<32x20xf32>, vector<8x20xf32> -> vector<8x20xf32>
    %4 = vector.broadcast %2 : vector<1x20xf32> to vector<8x20xf32>
    %5 = arith.addf %3, %4 : vector<8x20xf32>
    %cst_5 = arith.constant 0.000000e+00 : f32
    %6 = vector.broadcast %cst_5 : f32 to vector<8x20xf32>
    %7 = arith.maximumf %5, %6 : vector<8x20xf32>
    %c0_6 = arith.constant 0 : index
    %c0_7 = arith.constant 0 : index
    %8 = vector.load %arg4[%c0_6, %c0_7] : memref<8x20xf32, #tpu.memory_space<vmem>>, vector<8x20xf32>
    tpu.vector_store %arg4[%c0_6, %c0_7], %7 {strides = array<i32>} : memref<8x20xf32, #tpu.memory_space<vmem>>, vector<8x20xf32>,
    return
  }
  func.func @transform_0(%arg0: i32) -> (i32, i32) {
    %c0_i32 = arith.constant 0 : i32
    %c0_i32_0 = arith.constant 0 : i32
    return %arg0, %c0_i32 : i32, i32
  }
  func.func @transform_1(%arg0: i32) -> (i32, i32) {
    %c0_i32 = arith.constant 0 : i32
    %c0_i32_0 = arith.constant 0 : i32
    %c0_i32_1 = arith.constant 0 : i32
    return %c0_i32, %c0_i32_0 : i32, i32
  }
  func.func @transform_2(%arg0: i32) -> (i32, i32) {
    %c0_i32 = arith.constant 0 : i32
    %c0_i32_0 = arith.constant 0 : i32
    %c0_i32_1 = arith.constant 0 : i32
    return %c0_i32, %c0_i32_0 : i32, i32
  }
  func.func @transform_3(%arg0: i32) -> (i32, i32) {
    %c0_i32 = arith.constant 0 : i32
    %c0_i32_0 = arith.constant 0 : i32
    return %arg0, %c0_i32 : i32, i32
  }
}

</mosaic_0001>

<llo_original>
// kernel: tpu_custom_call.1
$region0: #{tpu_custom_call.1}
  #allocation0 [shape = 'u32[]', space=smem, size = 0x4, offset = 0x4, fixed_abs, tag = 'smem constant byte address 0x4 - core index']
  #allocation1 [shape = 'u32[144,128]{1,0:T(1,128)}', space=vmem, size = 0x12000, scoped, tag = 'internal scratch']
  %s0 = inlined_call_operand.vmem [shape: f32[8,32], index: 0, kind: input, shape index: {}]
  %s1 = inlined_call_operand.vmem [shape: f32[32,20], index: 1, kind: input, shape index: {}]
  %s2 = inlined_call_operand.vmem [shape: f32[1,20], index: 2, kind: input, shape index: {}]
  %s3 = inlined_call_operand.hbm [shape: f32[8,20], index: 3, kind: output, shape index: {}]
  %s4 = sld [smem:[#allocation0]]
  $region22: #{tpu_custom_call.1} parent=0
    _
  %s6 = ssub.s32 1, %s4
  %s7 = scalar_select 0, %s6, %s4
  $region1: #{tpu_custom_call.1} parent=0
    #allocation2 [shape = 'u8[4096]{0}', space=vmem, size = 0x1000, scoped, tag = 'output window, operand 0, single buffered']
    #allocation3 [shape = 's32[1]{0}', space=sflag, size = 0x4, scoped, tag = 'scoped memory for tpu_custom_call.1']
    %8 = vsyncpa [#allocation3], 0
    // Predicated region
    $region2: #{tpu_custom_call.1} parent=1 // pred_check
      _
    $region3: #{tpu_custom_call.1} parent=1 // pred_check_branch
      %10 = sbr.rel (0) target = $region5
    $region4: #{tpu_custom_call.1} parent=1 // pred_region
      _
    $region5: #{tpu_custom_call.1} parent=1 // pred_fallthru
      _
    // Predicated region
    $region6: #{tpu_custom_call.1} parent=1 // pred_check
      _
    $region7: #{tpu_custom_call.1} parent=1 // pred_check_branch
      %12 = sbr.rel (0) target = $region9
    $region8: #{tpu_custom_call.1} parent=1 // pred_region
      _
    $region9: #{tpu_custom_call.1} parent=1 // pred_fallthru
      _
    // Predicated region
    $region10: #{tpu_custom_call.1} parent=1 // pred_check
      _
    $region11: #{tpu_custom_call.1} parent=1 // pred_check_branch
      %14 = sbr.rel (0) target = $region13
    $region12: #{tpu_custom_call.1} parent=1 // pred_region
      _
    $region13: #{tpu_custom_call.1} parent=1 // pred_fallthru
      _
    %v15 = vld [vmem:[%s0] sm:$0xff]
    %v16 = vld [vmem:[%s1] sm:$0xff]
    %v17 = vld [vmem:[%s1 + $0x8] sm:$0xff]
    %v18 = vld [vmem:[%s1 + $0x10] sm:$0xff]
    %v19 = vld [vmem:[%s1 + $0x18] sm:$0xff]
    %v20 = vld [vmem:[%s2] sm:$0x1]
    %v22 = vlaneseq
    %v23 = vshrl.u32 %v22, 7
    %v24 = vsub.s32 0, %v23
    %v25 = vrot.slane %v20, %v24
    %vm27 = vcmask 261120
    %v29 = vsel %vm27, %v15, 0
    %31 = vmatprep.subr.mxu0 0.0
    %32 = vmatpush1.msra.mxu0 %v16
    %33 = vmatprep.subr.mxu0 0.0
    %34 = vmatpush1.msra.mxu0 %v17
    %35 = vmatprep.subr.mxu0 0.0
    %36 = vmatpush1.msra.mxu0 %v18
    %37 = vmatprep.subr.mxu0 0.0
    %38 = vmatpush1.msra.mxu0 %v19
    %39 = vmatprep.subr.mxu0 0.0
    %40 = vmatpush1.msra.mxu0 0.0
    %41 = vmatprep.subr.mxu0 0.0
    %42 = vmatpush1.msra.mxu0 0.0
    %43 = vmatprep.subr.mxu0 0.0
    %44 = vmatpush1.msra.mxu0 0.0
    %45 = vmatprep.subr.mxu0 0.0
    %46 = vmatpush1.msra.mxu0 0.0
    %47 = vmatprep.subr.mxu0 0.0
    %48 = vmatpush1.msra.mxu0 0.0
    %49 = vmatprep.subr.mxu0 0.0
    %50 = vmatpush1.msra.mxu0 0.0
    %51 = vmatprep.subr.mxu0 0.0
    %52 = vmatpush1.msra.mxu0 0.0
    %53 = vmatprep.subr.mxu0 0.0
    %54 = vmatpush1.msra.mxu0 0.0
    %55 = vmatprep.subr.mxu0 0.0
    %56 = vmatpush1.msra.mxu0 0.0
    %57 = vmatprep.subr.mxu0 0.0
    %58 = vmatpush1.msra.mxu0 0.0
    %59 = vmatprep.subr.mxu0 0.0
    %60 = vmatpush1.msra.mxu0 0.0
    %61 = vmatprep.subr.mxu0 0.0
    %62 = vmatpush1.msra.mxu0 0.0
    %63 = vmatprep.subr.mxu0 0.0
    %64 = vmatpush1.msra.mxu0 0.0
    %65 = vmatprep.subr.mxu0 0.0
    %66 = vmatpush1.msra.mxu0 0.0
    %67 = vmatprep.subr.mxu0 0.0
    %68 = vmatpush1.msra.mxu0 0.0
    %69 = vmatprep.subr.mxu0 0.0
    %70 = vmatpush1.msra.mxu0 0.0
    %71 = vmatprep.subr.mxu0 0.0
    %72 = vmatpush1.msra.mxu0 0.0
    %73 = vmatprep.subr.mxu0 0.0
    %74 = vmatpush1.msra.mxu0 0.0
    %75 = vmatprep.subr.mxu0 0.0
    %76 = vmatpush1.msra.mxu0 0.0
    %77 = vmatprep.subr.mxu0 0.0
    %78 = vmatpush1.msra.mxu0 0.0
    %79 = vmatprep.subr.mxu0 0.0
    %80 = vmatpush1.msra.mxu0 0.0
    %81 = vmatprep.subr.mxu0 0.0
    %82 = vmatpush1.msra.mxu0 0.0
    %83 = vmatprep.subr.mxu0 0.0
    %84 = vmatpush1.msra.mxu0 0.0
    %85 = vmatprep.subr.mxu0 0.0
    %86 = vmatpush1.msra.mxu0 0.0
    %87 = vmatprep.subr.mxu0 0.0
    %88 = vmatpush1.msra.mxu0 0.0
    %89 = vmatprep.subr.mxu0 0.0
    %90 = vmatpush1.msra.mxu0 0.0
    %91 = vmatprep.subr.mxu0 0.0
    %92 = vmatpush1.msra.mxu0 0.0
    %93 = vmatprep.subr.mxu0 0.0
    %94 = vmatpush1.msra.mxu0 0.0
    %95 = vmatprep.mubr.f32.mxu0 0.0
    %96 = vmatmul.mubr.f32.gmra.mrb[0].mxu0 %v29
    %v97 = vpop.f32.mrb[0].mxu0
    %v98 = vadd.f32 %v25, %v97
    %v99 = vpop.f32.mrb[0].mxu0
    %100 = vdwg.mxu0
    %v101 = vmax.f32 %v98, 0.0
    %vm102 = vcmask 162816
    %103 = vst.msk [vmem:[#allocation2] sm:$0xff] %vm102, %v101
    // Predicated region
    $region14: #{tpu_custom_call.1} parent=1 // pred_check
      _
    $region15: #{tpu_custom_call.1} parent=1 // pred_check_branch
      %105 = sbr.rel (0) target = $region17
    $region16: #{tpu_custom_call.1} parent=1 // pred_region
      %s107 = ssub.s32 128, 128
      %108 = vsyncadd [#allocation3], %s107
      %s110 = sshll.u32 [#allocation2], 4
      %s111 = int_to_ptr.vmem [resolvable:$true] %s110
      %113 = dma.vmem_to_hbm [thread:$0]  %s111, 128, %s3, [#allocation3]
    $region17: #{tpu_custom_call.1} parent=1 // pred_fallthru
      _
    // Predicated region
    $region18: #{tpu_custom_call.1} parent=1 // pred_check
      _
    $region19: #{tpu_custom_call.1} parent=1 // pred_check_branch
      %115 = sbr.rel (0) target = $region21
    $region20: #{tpu_custom_call.1} parent=1 // pred_region
      %116 = dma.done [#allocation3], 128
    $region21: #{tpu_custom_call.1} parent=1 // pred_fallthru
      _
    %117 = vsyncpa [#allocation3], 1

</llo_original>
